<compile_context>
chip_gen: v5e
topology: v5e:2x2
jax: 0.10.0
libtpu: 0.0.40
codegen_flags: <defaults>
</compile_context>

<pallas_src>
import jax
import jax.numpy as jnp
from jax.experimental import pallas as pl
from jax.experimental.pallas import tpu as pltpu


def _stacking_kernel(x_ref, wb_ref, bb_ref, wm_ref, bm_ref, o_ref):
    # x_ref : (C_in, T)    activation tile (channels on sublanes, spatial on lanes)
    # wb_ref: (E, C_in)    base-model weights
    # bb_ref: (E, 1)       base-model biases
    # wm_ref: (C_out, E)   meta-model weights
    # bm_ref: (C_out, 1)   meta-model bias
    # o_ref : (C_out, T)   ensemble prediction tile (lane-dense stores)
    x = x_ref[...].astype(jnp.float32)

    # Stacked base predictions: (E, T), kept in registers (never hits HBM).
    base = jnp.dot(wb_ref[...].astype(jnp.float32), x,
                   preferred_element_type=jnp.float32)
    base = base + bb_ref[...].astype(jnp.float32)

    # Meta-model combines the E stacked predictions: (C_out, T).
    out = jnp.dot(wm_ref[...].astype(jnp.float32), base,
                  preferred_element_type=jnp.float32)
    out = out + bm_ref[...].astype(jnp.float32)

    o_ref[...] = out.astype(o_ref.dtype)


def _pick_hw_tile(hw, cap=2048):
    """Largest divisor of hw that is a multiple of 128 and <= cap; else full hw."""
    if hw % 128 != 0:
        return hw  # full-extent block is always legal
    t = min(hw, cap)
    while hw % t:
        t -= 128
    return t


def stacking_ensemble(x_nchw, w_base, b_base, w_meta, b_meta):
    """x_nchw: (B, C_in, H, W); w_base: (E, C_in); b_base: (E,);
    w_meta: (C_out, E); b_meta: (C_out,).  Returns (B, C_out, H, W)."""
    B, C_in, H, W = x_nchw.shape
    E, _ = w_base.shape
    C_out, _ = w_meta.shape
    HW = H * W

    T = _pick_hw_tile(HW)
    n_t = HW // T

    # NCHW -> (B, C_in, H*W): pure reshape, no transpose, no extra HBM traffic.
    x3 = x_nchw.reshape(B, C_in, HW)
    bb = b_base.reshape(E, 1)
    bm = b_meta.reshape(C_out, 1)

    out3 = pl.pallas_call(
        _stacking_kernel,
        out_shape=jax.ShapeDtypeStruct((B, C_out, HW), x_nchw.dtype),
        grid_spec=pltpu.PrefetchScalarGridSpec(
            num_scalar_prefetch=0,
            grid=(B, n_t),
            in_specs=[
                # activation tile: batch squeezed, spatial tiled on lanes
                pl.BlockSpec((None, C_in, T), lambda b, t: (b, 0, t)),
                # tiny parameter slabs, whole-array blocks, resident in VMEM
                pl.BlockSpec((E, C_in), lambda b, t: (0, 0)),
                pl.BlockSpec((E, 1), lambda b, t: (0, 0)),
                pl.BlockSpec((C_out, E), lambda b, t: (0, 0)),
                pl.BlockSpec((C_out, 1), lambda b, t: (0, 0)),
            ],
            out_specs=pl.BlockSpec((None, C_out, T), lambda b, t: (b, 0, t)),
        ),
        compiler_params=pltpu.CompilerParams(
            dimension_semantics=("parallel", "parallel"),
        ),
    )(x3, w_base, bb, w_meta, bm)

    # (B, C_out, H*W) -> (B, C_out, H, W): free reshape, output already NCHW.
    return out3.reshape(B, C_out, H, W)


if __name__ == "__main__":
    key = jax.random.PRNGKey(0)
    kx, kwb, kbb, kwm, kbm = jax.random.split(key, 5)

    # Small stand-in for the module's (B, 3, 180, 360) input convention.
    B, C_in, H, W = 2, 3, 16, 16
    E, C_out = 4, 1  # 4 base models, meta-model emits one map

    x = jax.random.normal(kx, (B, C_in, H, W), dtype=jnp.float32)
    w_base = jax.random.normal(kwb, (E, C_in), dtype=jnp.float32) * 0.1
    b_base = jax.random.normal(kbb, (E,), dtype=jnp.float32) * 0.1
    w_meta = jax.random.normal(kwm, (C_out, E), dtype=jnp.float32) * 0.1
    b_meta = jax.random.normal(kbm, (C_out,), dtype=jnp.float32) * 0.1

    out = stacking_ensemble(x, w_base, b_base, w_meta, b_meta)
    out = jax.block_until_ready(out)

    # Pure-JAX reference mirroring the PyTorch forward:
    #   base preds -> stack over models -> meta-model.
    base = jnp.einsum("ec,bchw->behw", w_base, x) + b_base[None, :, None, None]
    ref = jnp.einsum("oe,behw->bohw", w_meta, base) + b_meta[None, :, None, None]

    assert out.shape == (B, C_out, H, W)
    assert jnp.allclose(out, ref, atol=1e-5, rtol=1e-5), "mismatch vs reference"
    print("KERNEL_OK")
</pallas_src>

<mosaic_0001>
module attributes {stable_mosaic.version = 11 : i64} {
  func.func @_stacking_kernel(%arg0: i32, %arg1: i32, %arg2: memref<1x3x256xf32, #tpu.memory_space<vmem>>, %arg3: memref<4x3xf32, #tpu.memory_space<vmem>>, %arg4: memref<4x1xf32, #tpu.memory_space<vmem>>, %arg5: memref<1x4xf32, #tpu.memory_space<vmem>>, %arg6: memref<1x1xf32, #tpu.memory_space<vmem>>, %arg7: memref<1x1x256xf32, #tpu.memory_space<vmem>>) attributes {dimension_semantics = [#tpu.dimension_semantics<parallel>, #tpu.dimension_semantics<parallel>], iteration_bounds = array<i64: 2, 1>, scalar_prefetch = 0 : i64, scratch_operands = 0 : i64, tpu.core_type = #tpu.core_type<tc>, window_params = [{transform_indices = @transform_0, window_bounds = array<i64: 1, 3, 256>}, {pipeline_mode = #tpu.pipeline_mode<synchronous>, transform_indices = @transform_1, window_bounds = array<i64: 4, 3>}, {pipeline_mode = #tpu.pipeline_mode<synchronous>, transform_indices = @transform_2, window_bounds = array<i64: 4, 1>}, {pipeline_mode = #tpu.pipeline_mode<synchronous>, transform_indices = @transform_3, window_bounds = array<i64: 1, 4>}, {pipeline_mode = #tpu.pipeline_mode<synchronous>, transform_indices = @transform_4, window_bounds = array<i64: 1, 1>}, {transform_indices = @transform_5, window_bounds = array<i64: 1, 1, 256>}]} {
    %c0 = arith.constant 0 : index
    %c0_0 = arith.constant 0 : index
    %c0_1 = arith.constant 0 : index
    %0 = vector.load %arg2[%c0, %c0_0, %c0_1] : memref<1x3x256xf32, #tpu.memory_space<vmem>>, vector<1x3x256xf32>
    %1 = vector.shape_cast %0 : vector<1x3x256xf32> to vector<3x256xf32>
    %c0_2 = arith.constant 0 : index
    %c0_3 = arith.constant 0 : index
    %2 = vector.load %arg3[%c0_2, %c0_3] : memref<4x3xf32, #tpu.memory_space<vmem>>, vector<4x3xf32>
    %cst = arith.constant dense<0.000000e+00> : vector<4x256xf32>
    %3 = tpu.matmul %2, %1, %cst {dimension_numbers = #tpu.dot_dimension_numbers<[1], [0], [0], [1], [0, 0, 1, 1], [], []>} : vector<4x3xf32>, vector<3x256xf32>, vector<4x256xf32> -> vector<4x256xf32>
    %c0_4 = arith.constant 0 : index
    %c0_5 = arith.constant 0 : index
    %4 = vector.load %arg4[%c0_4, %c0_5] : memref<4x1xf32, #tpu.memory_space<vmem>>, vector<4x1xf32>
    %5 = vector.broadcast %4 : vector<4x1xf32> to vector<4x256xf32>
    %6 = arith.addf %3, %5 : vector<4x256xf32>
    %c0_6 = arith.constant 0 : index
    %c0_7 = arith.constant 0 : index
    %7 = vector.load %arg5[%c0_6, %c0_7] : memref<1x4xf32, #tpu.memory_space<vmem>>, vector<1x4xf32>
    %cst_8 = arith.constant dense<0.000000e+00> : vector<1x256xf32>
    %8 = tpu.matmul %7, %6, %cst_8 {dimension_numbers = #tpu.dot_dimension_numbers<[1], [0], [0], [1], [0, 0, 1, 1], [], []>} : vector<1x4xf32>, vector<4x256xf32>, vector<1x256xf32> -> vector<1x256xf32>
    %c0_9 = arith.constant 0 : index
    %c0_10 = arith.constant 0 : index
    %9 = vector.load %arg6[%c0_9, %c0_10] : memref<1x1xf32, #tpu.memory_space<vmem>>, vector<1x1xf32>
    %10 = vector.broadcast %9 : vector<1x1xf32> to vector<1x256xf32>
    %11 = arith.addf %8, %10 : vector<1x256xf32>
    %c0_11 = arith.constant 0 : index
    %c0_12 = arith.constant 0 : index
    %c0_13 = arith.constant 0 : index
    %12 = vector.load %arg7[%c0_11, %c0_12, %c0_13] : memref<1x1x256xf32, #tpu.memory_space<vmem>>, vector<1x1x256xf32>
    %13 = vector.shape_cast %12 : vector<1x1x256xf32> to vector<1x256xf32>
    %14 = vector.shape_cast %11 : vector<1x256xf32> to vector<1x1x256xf32>
    tpu.vector_store %arg7[%c0_11, %c0_12, %c0_13], %14 {strides = array<i32>} : memref<1x1x256xf32, #tpu.memory_space<vmem>>, vector<1x1x256xf32>,
    return
  }
  func.func @transform_0(%arg0: i32, %arg1: i32) -> (i32, i32, i32) {
    %c0_i32 = arith.constant 0 : i32
    %c0_i32_0 = arith.constant 0 : i32
    return %arg0, %c0_i32, %arg1 : i32, i32, i32
  }
  func.func @transform_1(%arg0: i32, %arg1: i32) -> (i32, i32) {
    %c0_i32 = arith.constant 0 : i32
    %c0_i32_0 = arith.constant 0 : i32
    %c0_i32_1 = arith.constant 0 : i32
    return %c0_i32, %c0_i32_0 : i32, i32
  }
  func.func @transform_2(%arg0: i32, %arg1: i32) -> (i32, i32) {
    %c0_i32 = arith.constant 0 : i32
    %c0_i32_0 = arith.constant 0 : i32
    %c0_i32_1 = arith.constant 0 : i32
    return %c0_i32, %c0_i32_0 : i32, i32
  }
  func.func @transform_3(%arg0: i32, %arg1: i32) -> (i32, i32) {
    %c0_i32 = arith.constant 0 : i32
    %c0_i32_0 = arith.constant 0 : i32
    %c0_i32_1 = arith.constant 0 : i32
    return %c0_i32, %c0_i32_0 : i32, i32
  }
  func.func @transform_4(%arg0: i32, %arg1: i32) -> (i32, i32) {
    %c0_i32 = arith.constant 0 : i32
    %c0_i32_0 = arith.constant 0 : i32
    %c0_i32_1 = arith.constant 0 : i32
    return %c0_i32, %c0_i32_0 : i32, i32
  }
  func.func @transform_5(%arg0: i32, %arg1: i32) -> (i32, i32, i32) {
    %c0_i32 = arith.constant 0 : i32
    %c0_i32_0 = arith.constant 0 : i32
    return %arg0, %c0_i32, %arg1 : i32, i32, i32
  }
}

</mosaic_0001>

<llo_original>
// kernel: tpu_custom_call.1
$region0: #{tpu_custom_call.1}
  #allocation0 [shape = 'u32[]', space=smem, size = 0x4, offset = 0x4, fixed_abs, tag = 'smem constant byte address 0x4 - core index']
  #allocation1 [shape = 'u32[72,128]{1,0:T(1,128)}', space=vmem, size = 0x9000, scoped, tag = 'internal scratch']
  #allocation2 [shape = 'f32[1,1]{1,0:T(1,128)S(1)}', space=vmem, size = 0x200, scoped, tag = 'scoped memory for tpu_custom_call.1']
  %s0 = inlined_call_operand.vmem [shape: f32[2,3,256], index: 0, kind: input, shape index: {}]
  %s1 = inlined_call_operand.vmem [shape: f32[4,3], index: 1, kind: input, shape index: {}]
  %s2 = inlined_call_operand.vmem [shape: f32[4,1], index: 2, kind: input, shape index: {}]
  %s3 = inlined_call_operand.vmem [shape: f32[1,4], index: 3, kind: input, shape index: {}]
  %s4 = inlined_call_operand.<no memory space> [shape: f32[1,1], index: 4, kind: input, shape index: {}]
  %s5 = inlined_call_operand.hbm [shape: f32[2,1,256], index: 5, kind: output, shape index: {}]
  %s6 = sld [smem:[#allocation0]]
  $region53: #{tpu_custom_call.1} parent=0
    _
  %s8 = ssub.s32 1, %s6
  %s9 = scalar_select 0, %s8, %s6
  %v10 = vstv %s4
  %11 = vst [vmem:[#allocation2] sm:$0x1] %v10
  $region1: #{tpu_custom_call.1} parent=0
    #allocation3 [shape = 'u8[2048]{0}', space=vmem, size = 0x800, scoped, tag = 'output window, operand 0']
    #allocation4 [shape = 's32[2]{0}', space=sflag, size = 0x8, scoped, tag = 'scoped memory for tpu_custom_call.1']
    %12 = vsyncpa [#allocation4], 0
    %s13 = scalar_lea.sflag [#allocation4], 1
    %14 = vsyncpa %s13, 0
    loop: start=0, step=1, limit=4
    $region2: #{tpu_custom_call.1} parent=1 // loop_pre_header
      _
    $region3: #{tpu_custom_call.1} parent=1 // loop_header
      %s16 = sphi 0, %s20
      %p17 = scmp.ge.s32.totalorder %s16, 4
      %s23 = sphi 0, %s35
      %s24 = sphi 0, %s31
      %s25 = sphi 0, %s23
      %s26 = sphi 0, %s24
      %s27 = sphi 0, %s25
      %s28 = sphi 0, %s26
      %s40 = sphi 0, %s42
      %s43 = sphi 0, %s40
      %s44 = sphi 0, %s43
      %s60 = sphi 0, %s44
      %s64 = sphi 0, %s64
      %s66 = sphi 0, %s64
      %s67 = sphi 0, %s66
      %s81 = sphi 0, %s67
      %s85 = sphi 0, %s85
      %s87 = sphi 0, %s85
      %s88 = sphi 0, %s87
      %s102 = sphi 0, %s88
      %s106 = sphi 0, %s106
      %s108 = sphi 0, %s106
      %s109 = sphi 0, %s108
      %s123 = sphi 0, %s109
      %s127 = sphi 0, %s127
      %s129 = sphi 0, %s127
      %s130 = sphi 0, %s129
      %s144 = sphi 0, %s130
      %s152 = sphi 0, %s154
      %s155 = sphi 0, %s152
      %s156 = sphi 0, %s155
      %s172 = sphi 0, %s156
    $region4: #{tpu_custom_call.1} parent=1 // loop_header_branch
      %19 = sbr.rel (%p17) target = $region8
    $region5: #{tpu_custom_call.1} parent=1 // loop_body
      %s21 = ssub.s32 %s16, 1
      %s22 = ssub.s32 %s16, 2
      %s29 = sadd.s32 1, %s24
      %p30 = scmp.ge.s32.totalorder %s29, 1
      %s31 = scalar_select %p30, 0, %s29
      %s32 = sadd.s32 1, %s23
      %s33 = scalar_select %p30, %s32, %s23
      %p34 = scmp.ge.s32.totalorder %s33, 2
      %s35 = scalar_select %p34, 0, %s33
      %s36 = ssub.s32 %s23, %s35
      %s37 = ssub.s32 %s24, %s31
      %s38 = sor.u32 %s36, %s37
      %p39 = scmp.eq.s32.totalorder %s38, 0
      %s41 = sadd.s32 %s40, 1
      %s42 = scalar_select %p39, %s40, %s41
      %p45 = pneg %p39
      %p46 = scmp.eq.s32.totalorder %s16, 1
      %p47 = por %p45, %p46
      %p48 = scmp.ne.s32.totalorder %s40, %s43
      %p49 = scmp.eq.s32.totalorder %s16, 0
      %p50 = por %p48, %p49
      %p51 = scmp.ne.s32.totalorder %s40, %s43
      %p52 = scmp.eq.s32.totalorder %s21, 1
      %p53 = por %p51, %p52
      %p54 = scmp.ne.s32.totalorder %s43, %s44
      %p55 = scmp.eq.s32.totalorder %s21, 0
      %p56 = por %p54, %p55
      %p57 = scmp.ne.s32.totalorder %s43, %s44
      %p58 = scmp.eq.s32.totalorder %s22, 1
      %p59 = por %p57, %p58
      %p61 = scmp.ne.s32.totalorder %s44, %s60
      %p62 = scmp.eq.s32.totalorder %s22, 0
      %p63 = por %p61, %p62
      %s65 = sadd.s32 %s64, 1
      %p68 = scmp.eq.s32.totalorder %s16, 1
      %p69 = scmp.ne.s32.totalorder %s64, %s66
      %p70 = scmp.eq.s32.totalorder %s16, 0
      %p71 = por %p69, %p70
      %p72 = scmp.ne.s32.totalorder %s64, %s66
      %p73 = scmp.eq.s32.totalorder %s21, 1
      %p74 = por %p72, %p73
      %p75 = scmp.ne.s32.totalorder %s66, %s67
      %p76 = scmp.eq.s32.totalorder %s21, 0
      %p77 = por %p75, %p76
      %p78 = scmp.ne.s32.totalorder %s66, %s67
      %p79 = scmp.eq.s32.totalorder %s22, 1
      %p80 = por %p78, %p79
      %p82 = scmp.ne.s32.totalorder %s67, %s81
      %p83 = scmp.eq.s32.totalorder %s22, 0
      %p84 = por %p82, %p83
      %s86 = sadd.s32 %s85, 1
      %p89 = scmp.eq.s32.totalorder %s16, 1
      %p90 = scmp.ne.s32.totalorder %s85, %s87
      %p91 = scmp.eq.s32.totalorder %s16, 0
      %p92 = por %p90, %p91
      %p93 = scmp.ne.s32.totalorder %s85, %s87
      %p94 = scmp.eq.s32.totalorder %s21, 1
      %p95 = por %p93, %p94
      %p96 = scmp.ne.s32.totalorder %s87, %s88
      %p97 = scmp.eq.s32.totalorder %s21, 0
      %p98 = por %p96, %p97
      %p99 = scmp.ne.s32.totalorder %s87, %s88
      %p100 = scmp.eq.s32.totalorder %s22, 1
      %p101 = por %p99, %p100
      %p103 = scmp.ne.s32.totalorder %s88, %s102
      %p104 = scmp.eq.s32.totalorder %s22, 0
      %p105 = por %p103, %p104
      %s107 = sadd.s32 %s106, 1
      %p110 = scmp.eq.s32.totalorder %s16, 1
      %p111 = scmp.ne.s32.totalorder %s106, %s108
      %p112 = scmp.eq.s32.totalorder %s16, 0
      %p113 = por %p111, %p112
      %p114 = scmp.ne.s32.totalorder %s106, %s108
      %p115 = scmp.eq.s32.totalorder %s21, 1
      %p116 = por %p114, %p115
      %p117 = scmp.ne.s32.totalorder %s108, %s109
      %p118 = scmp.eq.s32.totalorder %s21, 0
      %p119 = por %p117, %p118
      %p120 = scmp.ne.s32.totalorder %s108, %s109
      %p121 = scmp.eq.s32.totalorder %s22, 1
      %p122 = por %p120, %p121
      %p124 = scmp.ne.s32.totalorder %s109, %s123
      %p125 = scmp.eq.s32.totalorder %s22, 0
      %p126 = por %p124, %p125
      %s128 = sadd.s32 %s127, 1
      %p131 = scmp.eq.s32.totalorder %s16, 1
      %p132 = scmp.ne.s32.totalorder %s127, %s129
      %p133 = scmp.eq.s32.totalorder %s16, 0
      %p134 = por %p132, %p133
      %p135 = scmp.ne.s32.totalorder %s127, %s129
      %p136 = scmp.eq.s32.totalorder %s21, 1
      %p137 = por %p135, %p136
      %p138 = scmp.ne.s32.totalorder %s129, %s130
      %p139 = scmp.eq.s32.totalorder %s21, 0
      %p140 = por %p138, %p139
      %p141 = scmp.ne.s32.totalorder %s129, %s130
      %p142 = scmp.eq.s32.totalorder %s22, 1
      %p143 = por %p141, %p142
      %p145 = scmp.ne.s32.totalorder %s130, %s144
      %p146 = scmp.eq.s32.totalorder %s22, 0
      %p147 = por %p145, %p146
      %s148 = ssub.s32 %s23, %s35
      %s149 = ssub.s32 %s24, %s31
      %s150 = sor.u32 %s148, %s149
      %p151 = scmp.eq.s32.totalorder %s150, 0
      %s153 = sadd.s32 %s152, 1
      %s154 = scalar_select %p151, %s152, %s153
      %p157 = pneg %p151
      %p158 = scmp.eq.s32.totalorder %s16, 1
      %p159 = por %p157, %p158
      %p160 = scmp.ne.s32.totalorder %s152, %s155
      %p161 = scmp.eq.s32.totalorder %s16, 0
      %p162 = por %p160, %p161
      %p163 = scmp.ne.s32.totalorder %s152, %s155
      %p164 = scmp.eq.s32.totalorder %s21, 1
      %p165 = por %p163, %p164
      %p166 = scmp.ne.s32.totalorder %s155, %s156
      %p167 = scmp.eq.s32.totalorder %s21, 0
      %p168 = por %p166, %p167
      %p169 = scmp.ne.s32.totalorder %s155, %s156
      %p170 = scmp.eq.s32.totalorder %s22, 1
      %p171 = por %p169, %p170
      %p173 = scmp.ne.s32.totalorder %s156, %s172
      %p174 = scmp.eq.s32.totalorder %s22, 0
      %p175 = por %p173, %p174
      %p176 = scmp.le.s32.totalorder 1, %s16
      %p177 = scmp.lt.s32.totalorder %s16, 3
      %p178 = pnand %p176, %p177
      %p179 = pneg %p178
      // Predicated region
      $region9: #{tpu_custom_call.1} parent=5 // pred_check
        _
      $region10: #{tpu_custom_call.1} parent=5 // pred_check_branch
        %181 = sbr.rel (%p178) target = $region12
      $region11: #{tpu_custom_call.1} parent=5 // pred_region
        %s182 = ssub.s32 %s16, 1
        // Predicated region
        $region13: #{tpu_custom_call.1} parent=11 // pred_check
          %p183 = pneg %p77
        $region14: #{tpu_custom_call.1} parent=11 // pred_check_branch
          %185 = sbr.rel (%p183) target = $region16
        $region15: #{tpu_custom_call.1} parent=11 // pred_region
          _
        $region16: #{tpu_custom_call.1} parent=11 // pred_fallthru
          _
        // Predicated region
        $region17: #{tpu_custom_call.1} parent=11 // pred_check
          %p186 = pneg %p98
        $region18: #{tpu_custom_call.1} parent=11 // pred_check_branch
          %188 = sbr.rel (%p186) target = $region20
        $region19: #{tpu_custom_call.1} parent=11 // pred_region
          _
        $region20: #{tpu_custom_call.1} parent=11 // pred_fallthru
          _
        // Predicated region
        $region21: #{tpu_custom_call.1} parent=11 // pred_check
          %p189 = pneg %p119
        $region22: #{tpu_custom_call.1} parent=11 // pred_check_branch
          %191 = sbr.rel (%p189) target = $region24
        $region23: #{tpu_custom_call.1} parent=11 // pred_region
          _
        $region24: #{tpu_custom_call.1} parent=11 // pred_fallthru
          _
        // Predicated region
        $region25: #{tpu_custom_call.1} parent=11 // pred_check
          %p192 = pneg %p140
        $region26: #{tpu_custom_call.1} parent=11 // pred_check_branch
          %194 = sbr.rel (%p192) target = $region28
        $region27: #{tpu_custom_call.1} parent=11 // pred_region
          _
        $region28: #{tpu_custom_call.1} parent=11 // pred_fallthru
          _
      $region12: #{tpu_custom_call.1} parent=5 // pred_fallthru
        _
      %p195 = scmp.lt.s32.totalorder %s16, 2
      // Predicated region
      $region29: #{tpu_custom_call.1} parent=5 // pred_check
        %p196 = pneg %p195
      $region30: #{tpu_custom_call.1} parent=5 // pred_check_branch
        %198 = sbr.rel (%p196) target = $region32
      $region31: #{tpu_custom_call.1} parent=5 // pred_region
        // Predicated region
        $region33: #{tpu_custom_call.1} parent=31 // pred_check
          %p199 = pneg %p50
        $region34: #{tpu_custom_call.1} parent=31 // pred_check_branch
          %201 = sbr.rel (%p199) target = $region36
        $region35: #{tpu_custom_call.1} parent=31 // pred_region
          %s202 = smul.u32 2, %s24
          %p203 = scmp.lt.s32.totalorder %s23, 1
          %s204 = scalar_select %p203, %s23, 1
          %p205 = scmp.lt.s32.totalorder %s202, 1
          %s206 = scalar_select %p205, %s202, 1
          %s207 = smul.addr %s204, 2
          %s208 = sadd.s32 %s206, %s207
          %s209 = smul.addr %s208, 4
          %s210 = scalar_lea.vmem %s0, %s209
          %s211 = smul.u32 2, %s24
        $region36: #{tpu_custom_call.1} parent=31 // pred_fallthru
          _
      $region32: #{tpu_custom_call.1} parent=5 // pred_fallthru
        _
      %p212 = scmp.le.s32.totalorder 1, %s16
      %p213 = scmp.lt.s32.totalorder %s16, 3
      %p214 = pnand %p212, %p213
      %p215 = pneg %p214
      // Predicated region
      $region37: #{tpu_custom_call.1} parent=5 // pred_check
        _
      $region38: #{tpu_custom_call.1} parent=5 // pred_check_branch
        %217 = sbr.rel (%p214) target = $region40
      $region39: #{tpu_custom_call.1} parent=5 // pred_region
        %s218 = ssub.s32 %s16, 1
        %s219 = smul.u32 2, %s26
        %p220 = scmp.lt.s32.totalorder %s25, 1
        %s221 = scalar_select %p220, %s25, 1
        %p222 = scmp.lt.s32.totalorder %s219, 1
        %s223 = scalar_select %p222, %s219, 1
        %s224 = smul.addr %s221, 2
        %s225 = sadd.s32 %s223, %s224
        %s226 = smul.addr %s225, 4
        %s227 = scalar_lea.vmem %s0, %s226
        %p228 = pneg %p56
        %p229 = pneg %p53
        %p230 = pneg %p77
        %p231 = pneg %p74
        %p232 = pneg %p98
        %p233 = pneg %p95
        %p234 = pneg %p119
        %p235 = pneg %p116
        %p236 = pneg %p140
        %p237 = pneg %p137
        %p238 = pneg %p168
        %p239 = pneg %p165
        %s240 = sand.u32 %s155, 1
        %s241 = scalar_lea.sflag [#allocation4], %s240
        %s242 = sand.u32 %s155, 1
        %s243 = smul.addr %s242, 2
        %s244 = scalar_lea.vmem [#allocation3], %s243
        %s245 = smul.u32 2, %s26
        %p246 = scmp.lt.s32.totalorder %s25, 1
        %s247 = scalar_select %p246, %s25, 1
        %p248 = scmp.lt.s32.totalorder %s245, 1
        %s249 = scalar_select %p248, %s245, 1
        %s250 = smul.addr %s247, 2
        %s251 = sadd.s32 %s249, %s250
        %s252 = smul.addr %s251, 4
        %s253 = scalar_lea.vmem %s0, %s252
        %s254 = smul.u32 2, %s26
        %s255 = smul.u32 2, %s26
        %v256 = vld [vmem:[%s253] sm:$0x77]
        %v257 = vld [vmem:[%s1] sm:$0xf]
        %v258 = vld [vmem:[%s2] sm:$0xf]
        %260 = vset.pattern.permute.xlu0 0
        %261 = vperm.xlu0 %260, %v258
        %v262 = vpop.permute.xlu0 %261
        %265 = vst [vmem:[#allocation1] ss:$2 sm:$0xff] %v256
        %v266 = vld.sshfl [vmem:[#allocation1] sm:$0xff pattern:$0x75316420]
        %v267 = vld.sshfl [vmem:[#allocation1 + $0x8] sm:$0xff pattern:$0x75316420]
        %vm268 = vcmask 23552
        %v270 = vsel %vm268, %v257, 0
        %vm272 = vcmask 1042432
        %v273 = vsel %vm272, %v266, 0
        %v275 = vsel %vm272, %v267, 0
        %277 = vmatpush.msra.mxu0 0.0
        %278 = vmatpush.msra.mxu0 0.0
        %279 = vmatpush.msra.mxu0 0.0
        %280 = vmatpush.msra.mxu0 0.0
        %281 = vmatpush.msra.mxu0 0.0
        %282 = vmatpush.msra.mxu0 0.0
        %283 = vmatpush.msra.mxu0 0.0
        %284 = vmatpush.msra.mxu0 0.0
        %285 = vmatpush.msra.mxu0 0.0
        %286 = vmatpush.msra.mxu0 0.0
        %287 = vmatpush.msra.mxu0 0.0
        %288 = vmatpush.msra.mxu0 0.0
        %289 = vmatpush.msra.mxu0 0.0
        %290 = vmatpush.msra.mxu0 0.0
        %291 = vmatpush.msra.mxu0 0.0
        %292 = vmatpush.msra.mxu0 %v273
        %293 = vmatmul.f32.gmra.mxu0 %v270
        %v294 = vpop.f32.mrf.mxu0
        %v295 = vadd.f32 %v262, %v294
        %296 = vdwg.mxu0
        %297 = vmatpush.msra.mxu0 0.0
        %298 = vmatpush.msra.mxu0 0.0
        %299 = vmatpush.msra.mxu0 0.0
        %300 = vmatpush.msra.mxu0 0.0
        %301 = vmatpush.msra.mxu0 0.0
        %302 = vmatpush.msra.mxu0 0.0
        %303 = vmatpush.msra.mxu0 0.0
        %304 = vmatpush.msra.mxu0 0.0
        %305 = vmatpush.msra.mxu0 0.0
        %306 = vmatpush.msra.mxu0 0.0
        %307 = vmatpush.msra.mxu0 0.0
        %308 = vmatpush.msra.mxu0 0.0
        %309 = vmatpush.msra.mxu0 0.0
        %310 = vmatpush.msra.mxu0 0.0
        %311 = vmatpush.msra.mxu0 0.0
        %312 = vmatpush.msra.mxu0 %v275
        %313 = vmatmul.f32.gmra.mxu0 %v270
        %v314 = vpop.f32.mrf.mxu0
        %v315 = vadd.f32 %v262, %v314
        %316 = vdwg.mxu0
        %v317 = vld [vmem:[%s3] sm:$0x1]
        %v318 = vld [vmem:[#allocation2] sm:$0x1]
        %320 = vset.pattern.permute.xlu0 0
        %321 = vperm.xlu0 %320, %v318
        %v322 = vpop.permute.xlu0 %321
        %v324 = vperm.slane %v322, 0
        %vm325 = vcmask 31744
        %v327 = vsel %vm325, %v317, 0
        %vm329 = vcmask 1043456
        %v331 = vsel %vm329, %v295, 0
        %v334 = vsel %vm329, %v315, 0
        %336 = vmatpush.msra.mxu0 0.0
        %337 = vmatpush.msra.mxu0 0.0
        %338 = vmatpush.msra.mxu0 0.0
        %339 = vmatpush.msra.mxu0 0.0
        %340 = vmatpush.msra.mxu0 0.0
        %341 = vmatpush.msra.mxu0 0.0
        %342 = vmatpush.msra.mxu0 0.0
        %343 = vmatpush.msra.mxu0 0.0
        %344 = vmatpush.msra.mxu0 0.0
        %345 = vmatpush.msra.mxu0 0.0
        %346 = vmatpush.msra.mxu0 0.0
        %347 = vmatpush.msra.mxu0 0.0
        %348 = vmatpush.msra.mxu0 0.0
        %349 = vmatpush.msra.mxu0 0.0
        %350 = vmatpush.msra.mxu0 0.0
        %351 = vmatpush.msra.mxu0 %v331
        %352 = vmatmul.f32.gmra.mxu0 %v327
        %v353 = vpop.f32.mrf.mxu0
        %v354 = vadd.f32 %v324, %v353
        %355 = vdwg.mxu0
        %356 = vmatpush.msra.mxu0 0.0
        %357 = vmatpush.msra.mxu0 0.0
        %358 = vmatpush.msra.mxu0 0.0
        %359 = vmatpush.msra.mxu0 0.0
        %360 = vmatpush.msra.mxu0 0.0
        %361 = vmatpush.msra.mxu0 0.0
        %362 = vmatpush.msra.mxu0 0.0
        %363 = vmatpush.msra.mxu0 0.0
        %364 = vmatpush.msra.mxu0 0.0
        %365 = vmatpush.msra.mxu0 0.0
        %366 = vmatpush.msra.mxu0 0.0
        %367 = vmatpush.msra.mxu0 0.0
        %368 = vmatpush.msra.mxu0 0.0
        %369 = vmatpush.msra.mxu0 0.0
        %370 = vmatpush.msra.mxu0 0.0
        %371 = vmatpush.msra.mxu0 %v334
        %372 = vmatmul.f32.gmra.mxu0 %v327
        %v373 = vpop.f32.mrf.mxu0
        %v374 = vadd.f32 %v324, %v373
        %375 = vdwg.mxu0
        %v378 = vrot.slane %v374, 7
        %vm379 = vcmask 1040384
        %v380 = vsel %vm379, %v354, %v378
        %v382 = vlaneseq
        %vm383 = vcmp.ge.s32.totalorder %v382, 0
        %vm384 = vcmp.lt.s32.totalorder %v382, 256
        %vm385 = vmand %vm383, %vm384
        %386 = vst.msk [vmem:[%s244] sm:$0x3] %vm385, %v380
        %s387 = sand.u32 %s155, 1
        %s388 = scalar_lea.sflag [#allocation4], %s387
        %s389 = sand.u32 %s155, 1
        %s390 = smul.addr %s389, 2
        %s391 = scalar_lea.vmem [#allocation3], %s390
        // Predicated region
        $region41: #{tpu_custom_call.1} parent=39 // pred_check
          %p392 = pneg %p165
        $region42: #{tpu_custom_call.1} parent=39 // pred_check_branch
          %394 = sbr.rel (%p392) target = $region44
        $region43: #{tpu_custom_call.1} parent=39 // pred_region
          %s395 = smul.u32 2, %s26
          %397 = vsyncadd %s388, 0
          %s398 = smul.addr %s25, 2
          %s399 = sadd.s32 %s395, %s398
          %s400 = scalar_lea.hbm %s5, %s399
          %s402 = sshll.u32 %s391, 4
          %s403 = int_to_ptr.vmem [resolvable:$true] %s402
          %s404 = sshll.u32 %s400, 4
          %s405 = int_to_ptr.hbm [resolvable:$true] %s404
          %407 = dma.vmem_to_hbm [thread:$0]  %s403, 32, %s405, %s388
        $region44: #{tpu_custom_call.1} parent=39 // pred_fallthru
          _
      $region40: #{tpu_custom_call.1} parent=5 // pred_fallthru
        _
      %p408 = scmp.le.s32.totalorder 2, %s16
      // Predicated region
      $region45: #{tpu_custom_call.1} parent=5 // pred_check
        %p409 = pneg %p408
      $region46: #{tpu_custom_call.1} parent=5 // pred_check_branch
        %411 = sbr.rel (%p409) target = $region48
      $region47: #{tpu_custom_call.1} parent=5 // pred_region
        %s412 = ssub.s32 %s16, 2
        // Predicated region
        $region49: #{tpu_custom_call.1} parent=47 // pred_check
          %p413 = pneg %p171
        $region50: #{tpu_custom_call.1} parent=47 // pred_check_branch
          %415 = sbr.rel (%p413) target = $region52
        $region51: #{tpu_custom_call.1} parent=47 // pred_region
          %s416 = sand.u32 %s156, 1
          %s417 = scalar_lea.sflag [#allocation4], %s416
          %s418 = sand.u32 %s156, 1
          %s419 = smul.addr %s418, 2
          %s420 = scalar_lea.vmem [#allocation3], %s419
          %422 = dma.done %s417, 32
        $region52: #{tpu_custom_call.1} parent=47 // pred_fallthru
          _
      $region48: #{tpu_custom_call.1} parent=5 // pred_fallthru
        _
    $region6: #{tpu_custom_call.1} parent=1 // loop_footer
      %s20 = sadd.s32 1, %s16
    $region7: #{tpu_custom_call.1} parent=1 // loop_footer_branch
      %15 = sbr.rel target = $region3
    $region8: #{tpu_custom_call.1} parent=1 // loop_exit
      _
    %423 = vsyncpa [#allocation4], 1
    %s424 = scalar_lea.sflag [#allocation4], 1
    %425 = vsyncpa %s424, 1

</llo_original>
